<compile_context>
chip_gen: v5e
topology: v5e:2x2
jax: 0.10.0
libtpu: 0.0.40
codegen_flags: <defaults>
</compile_context>

<pallas_src>
import functools

import jax
import jax.numpy as jnp
from jax.experimental import pallas as pl
from jax.experimental.pallas import tpu as pltpu


COMPUTE_DTYPE = jnp.bfloat16   # MXU operand dtype (accumulation stays f32)
LANE = 128                     # lane width; N/K tiles padded to multiples


# ------------------------------ small helpers ------------------------------ #

def _round_up(x, m):
    return (x + m - 1) // m * m


@functools.lru_cache(maxsize=None)
def _chip_config():
    """Generation-aware tile / VMEM limits (v7x has only 64 MiB VMEM per TC)."""
    try:
        vmem_cap = pltpu.get_tpu_info().vmem_capacity_bytes
    except Exception:
        vmem_cap = 64 * 2**20  # conservative (v7x-like) default
    if vmem_cap >= 100 * 2**20:                       # v5e / v6e (128 MiB)
        return {"tm_max": 2048, "vmem_limit": 96 * 2**20}
    return {"tm_max": 1024, "vmem_limit": 48 * 2**20}  # v7x (64 MiB)


def _pad2(a, rows, cols):
    r, c = a.shape
    if r == rows and c == cols:
        return a
    return jnp.pad(a, ((0, rows - r), (0, cols - c)))


def _gemm_tiles(M, K, Cout):
    cfg = _chip_config()
    TN = LANE
    TM = min(cfg["tm_max"], _round_up(M, 8))
    Mp = _round_up(M, TM)
    TK = min(512, _round_up(K, LANE))
    Kp = _round_up(K, TK)
    Np = _round_up(Cout, TN)
    return cfg, TM, Mp, TK, Kp, TN, Np


# ----------------------------- Pallas kernels ------------------------------ #

def _head_kernel(p3_ref, w1_ref, b1_ref, p1_ref, wd_ref, bd_ref,
                 y1_ref, id_ref, acc1_ref, accd_ref):
    """Fused: y1 = relu(p3 @ w1 + b1) and ident = p1 @ wd + bd.

    K grid axis tiles the conv1 (3x3) contraction; the 1x1 downsample is a
    single K block computed once at k == 0.  BN scales are pre-folded into the
    weights; accumulation is f32 in VMEM scratch.
    """
    k = pl.program_id(2)

    @pl.when(k == 0)
    def _():
        acc1_ref[...] = jnp.zeros_like(acc1_ref)
        accd_ref[...] = jnp.dot(p1_ref[...], wd_ref[...],
                                preferred_element_type=jnp.float32)

    acc1_ref[...] += jnp.dot(p3_ref[...], w1_ref[...],
                             preferred_element_type=jnp.float32)

    @pl.when(k == pl.num_programs(2) - 1)
    def _():
        y1_ref[...] = jnp.maximum(acc1_ref[...] + b1_ref[...],
                                  0.0).astype(y1_ref.dtype)
        id_ref[...] = (accd_ref[...] + bd_ref[...]).astype(id_ref.dtype)


def _tail_kernel(p_ref, w_ref, b_ref, r_ref, o_ref, acc_ref):
    """Fused: out = relu(p @ w + b + residual), K-tiled with f32 accumulator."""
    k = pl.program_id(2)

    @pl.when(k == 0)
    def _():
        acc_ref[...] = jnp.zeros_like(acc_ref)

    acc_ref[...] += jnp.dot(p_ref[...], w_ref[...],
                            preferred_element_type=jnp.float32)

    @pl.when(k == pl.num_programs(2) - 1)
    def _():
        o_ref[...] = jnp.maximum(
            acc_ref[...] + b_ref[...] + r_ref[...].astype(jnp.float32), 0.0
        ).astype(o_ref.dtype)


# ------------------------------ kernel wrappers ----------------------------- #

def fused_block_head(p3, w1, b1, p1, wd, bd):
    """One pallas_call producing conv1(3x3)+BN+ReLU and downsample(1x1)+BN."""
    M, K3 = p3.shape
    K1 = p1.shape[1]
    Cout = w1.shape[1]
    cfg, TM, Mp, TK3, K3p, TN, Np = _gemm_tiles(M, K3, Cout)
    K1p = _round_up(K1, LANE)  # single K block for the 1x1 downsample

    p3p = _pad2(p3, Mp, K3p).astype(COMPUTE_DTYPE)
    w1p = _pad2(w1, K3p, Np).astype(COMPUTE_DTYPE)
    p1p = _pad2(p1, Mp, K1p).astype(COMPUTE_DTYPE)
    wdp = _pad2(wd, K1p, Np).astype(COMPUTE_DTYPE)
    b1p = _pad2(b1.reshape(1, Cout).astype(jnp.float32), 1, Np)
    bdp = _pad2(bd.reshape(1, Cout).astype(jnp.float32), 1, Np)

    grid = (Mp // TM, Np // TN, K3p // TK3)
    itemsize = jnp.dtype(COMPUTE_DTYPE).itemsize
    cost = pl.CostEstimate(
        flops=2 * Mp * Np * (K3p + K1p),
        transcendentals=0,
        bytes_accessed=(p3p.size + w1p.size + p1p.size + wdp.size) * itemsize
        + (b1p.size + bdp.size + 2 * Mp * Np) * 4)

    y1p, idp = pl.pallas_call(
        _head_kernel,
        out_shape=(jax.ShapeDtypeStruct((Mp, Np), jnp.float32),
                   jax.ShapeDtypeStruct((Mp, Np), jnp.float32)),
        grid_spec=pltpu.PrefetchScalarGridSpec(
            num_scalar_prefetch=0,
            grid=grid,
            in_specs=[
                pl.BlockSpec((TM, TK3), lambda i, j, k: (i, k)),
                pl.BlockSpec((TK3, TN), lambda i, j, k: (k, j)),
                pl.BlockSpec((1, TN), lambda i, j, k: (0, j)),
                pl.BlockSpec((TM, K1p), lambda i, j, k: (i, 0)),
                pl.BlockSpec((K1p, TN), lambda i, j, k: (0, j)),
                pl.BlockSpec((1, TN), lambda i, j, k: (0, j)),
            ],
            out_specs=[
                pl.BlockSpec((TM, TN), lambda i, j, k: (i, j)),
                pl.BlockSpec((TM, TN), lambda i, j, k: (i, j)),
            ],
            scratch_shapes=[pltpu.VMEM((TM, TN), jnp.float32),
                            pltpu.VMEM((TM, TN), jnp.float32)]),
        compiler_params=pltpu.CompilerParams(
            dimension_semantics=("parallel", "parallel", "arbitrary"),
            vmem_limit_bytes=cfg["vmem_limit"]),
        cost_estimate=cost,
    )(p3p, w1p, b1p, p1p, wdp, bdp)
    return y1p[:M, :Cout], idp[:M, :Cout]


def fused_block_tail(p, w, b, residual):
    """One pallas_call: conv2(3x3) GEMM + bias + residual add + ReLU."""
    M, K = p.shape
    Cout = w.shape[1]
    cfg, TM, Mp, TK, Kp, TN, Np = _gemm_tiles(M, K, Cout)

    pp = _pad2(p, Mp, Kp).astype(COMPUTE_DTYPE)
    wp = _pad2(w, Kp, Np).astype(COMPUTE_DTYPE)
    bp = _pad2(b.reshape(1, Cout).astype(jnp.float32), 1, Np)
    rp = _pad2(residual.astype(jnp.float32), Mp, Np)

    grid = (Mp // TM, Np // TN, Kp // TK)
    itemsize = jnp.dtype(COMPUTE_DTYPE).itemsize
    cost = pl.CostEstimate(
        flops=2 * Mp * Np * Kp,
        transcendentals=0,
        bytes_accessed=(pp.size + wp.size) * itemsize
        + (bp.size + rp.size + Mp * Np) * 4)

    out = pl.pallas_call(
        _tail_kernel,
        out_shape=jax.ShapeDtypeStruct((Mp, Np), jnp.float32),
        grid_spec=pltpu.PrefetchScalarGridSpec(
            num_scalar_prefetch=0,
            grid=grid,
            in_specs=[
                pl.BlockSpec((TM, TK), lambda i, j, k: (i, k)),
                pl.BlockSpec((TK, TN), lambda i, j, k: (k, j)),
                pl.BlockSpec((1, TN), lambda i, j, k: (0, j)),
                pl.BlockSpec((TM, TN), lambda i, j, k: (i, j)),
            ],
            out_specs=pl.BlockSpec((TM, TN), lambda i, j, k: (i, j)),
            scratch_shapes=[pltpu.VMEM((TM, TN), jnp.float32)]),
        compiler_params=pltpu.CompilerParams(
            dimension_semantics=("parallel", "parallel", "arbitrary"),
            vmem_limit_bytes=cfg["vmem_limit"]),
        cost_estimate=cost,
    )(pp, wp, bp, rp)
    return out[:M, :Cout]


# ------------------------------- JAX glue ----------------------------------- #

def _im2col(x, kh, kw, stride, pad):
    """x: NHWC -> ([N*Ho*Wo, kh*kw*C], N, Ho, Wo). Pure reshuffle (glue)."""
    N, H, W, C = x.shape
    if pad > 0:
        x = jnp.pad(x, ((0, 0), (pad, pad), (pad, pad), (0, 0)))
    Hp, Wp = H + 2 * pad, W + 2 * pad
    Ho = (Hp - kh) // stride + 1
    Wo = (Wp - kw) // stride + 1
    cols = []
    for i in range(kh):
        for j in range(kw):
            cols.append(
                x[:, i:i + stride * (Ho - 1) + 1:stride,
                     j:j + stride * (Wo - 1) + 1:stride, :])
    cols = jnp.concatenate(cols, axis=-1)  # [N, Ho, Wo, kh*kw*C]
    return cols.reshape(N * Ho * Wo, kh * kw * C), N, Ho, Wo


def basic_block(x, params):
    """ResNet BasicBlock with 1x1 downsample. x: NHWC -> NHWC."""
    s = params["stride"]
    cout = params["w1"].shape[-1]

    # TODO(synk): fuse im2col into the kernel (halo'd NHWC tiles + 9 shifted
    # dots) to cut activation HBM read traffic ~9x on mem-bound stages.
    p3, N, Ho, Wo = _im2col(x, 3, 3, s, 1)
    p1, _, _, _ = _im2col(x, 1, 1, s, 0)

    # Fold BN scale into the conv weights at trace time.
    w1 = params["w1"].reshape(-1, cout) * params["s1"][None, :]
    wd = params["wd"].reshape(-1, cout) * params["sd"][None, :]
    w2 = params["w2"].reshape(-1, cout) * params["s2"][None, :]

    # Kernel 1: conv1(3x3, stride s)+BN+ReLU fused with downsample(1x1)+BN.
    y1, ident = fused_block_head(p3, w1, params["b1"], p1, wd, params["bd"])
    y1 = y1.reshape(N, Ho, Wo, cout)

    # Kernel 2: conv2(3x3, stride 1)+BN + residual add + ReLU.
    p2, _, _, _ = _im2col(y1, 3, 3, 1, 1)
    y2 = fused_block_tail(p2, w2, params["b2"], ident)
    return y2.reshape(N, Ho, Wo, cout)


def init_block_params(key, cin, cout, stride):
    ks = jax.random.split(key, 7)

    def conv_w(k, kh, kw, ci, co):
        fan = kh * kw * ci
        return jax.random.normal(k, (kh, kw, ci, co), jnp.float32) * (2.0 / fan) ** 0.5

    return dict(
        stride=stride,
        w1=conv_w(ks[0], 3, 3, cin, cout),
        s1=1.0 + 0.1 * jax.random.normal(ks[1], (cout,), jnp.float32),
        b1=0.1 * jax.random.normal(ks[2], (cout,), jnp.float32),
        w2=conv_w(ks[3], 3, 3, cout, cout),
        s2=1.0 + 0.1 * jax.random.normal(ks[4], (cout,), jnp.float32),
        b2=0.1 * jax.random.normal(ks[5], (cout,), jnp.float32),
        wd=conv_w(ks[6], 1, 1, cin, cout),
        sd=jnp.ones((cout,), jnp.float32),
        bd=jnp.zeros((cout,), jnp.float32),
    )


class TaskEncoderPallas:
    """JAX/Pallas equivalent of TaskEncoder: chain layer{block}..layer{num_en_features-1},
    returning every intermediate output (input excluded), like the torch module."""

    def __init__(self, block, num_en_features, base_planes, key):
        self.block = block
        self.num_en_features = num_en_features
        planes = [base_planes * (2 ** i) for i in range(num_en_features)]
        strides = [1, 2, 2, 2]
        self.layer_params = {}
        for idx in range(block, num_en_features):
            cin = planes[idx - 1] if idx > 0 else base_planes
            key, sub = jax.random.split(key)
            self.layer_params[idx] = init_block_params(sub, cin, planes[idx], strides[idx])

    def forward(self, x_nchw):
        # external interface NCHW (PyTorch), internal compute NHWC.
        x = jnp.transpose(x_nchw, (0, 2, 3, 1))
        outs = [x]
        for idx in range(self.block, self.num_en_features):
            outs.append(basic_block(outs[-1], self.layer_params[idx]))
        outs.pop(0)
        return [jnp.transpose(o, (0, 3, 1, 2)) for o in outs]


# ----------------------------- reference check ----------------------------- #

def _ref_gemm(p, w, b):
    # mirror the kernel's bf16 MXU operands + f32 accumulation/epilogue
    pf = p.astype(COMPUTE_DTYPE).astype(jnp.float32)
    wf = w.astype(COMPUTE_DTYPE).astype(jnp.float32)
    return pf @ wf + b[None, :].astype(jnp.float32)


def _ref_basic_block(x, params):
    s = params["stride"]
    cout = params["w1"].shape[-1]
    p3, N, Ho, Wo = _im2col(x, 3, 3, s, 1)
    p1, _, _, _ = _im2col(x, 1, 1, s, 0)
    w1 = params["w1"].reshape(-1, cout) * params["s1"][None, :]
    wd = params["wd"].reshape(-1, cout) * params["sd"][None, :]
    w2 = params["w2"].reshape(-1, cout) * params["s2"][None, :]
    y1 = jnp.maximum(_ref_gemm(p3, w1, params["b1"]), 0.0).reshape(N, Ho, Wo, cout)
    ident = _ref_gemm(p1, wd, params["bd"])
    p2, _, _, _ = _im2col(y1, 3, 3, 1, 1)
    y2 = jnp.maximum(_ref_gemm(p2, w2, params["b2"]) + ident, 0.0)
    return y2.reshape(N, Ho, Wo, cout)


if __name__ == "__main__":
    key = jax.random.PRNGKey(0)
    k_x, k_p = jax.random.split(key)

    # Small shapes consistent with the module: x feeds layer{block}=layer1 of a
    # tiny ResNet with planes [4, 8, 16, 32]; block=1, num_en_features=4.
    N, C, H, W = 2, 4, 16, 16
    x = jax.random.normal(k_x, (N, C, H, W), jnp.float32)

    enc = TaskEncoderPallas(block=1, num_en_features=4, base_planes=4, key=k_p)
    outs = enc.forward(x)
    outs = [jax.block_until_ready(o) for o in outs]

    # Expected shapes (NCHW), mirroring the torch module's list of stage outputs.
    expected = [(2, 8, 8, 8), (2, 16, 4, 4), (2, 32, 2, 2)]
    assert [tuple(o.shape) for o in outs] == expected, [o.shape for o in outs]

    # Pure-JAX reference of the same math to validate the Pallas kernels.
    x_nhwc = jnp.transpose(x, (0, 2, 3, 1))
    cur = x_nhwc
    ref_outs = []
    for idx in range(1, 4):
        cur = _ref_basic_block(cur, enc.layer_params[idx])
        ref_outs.append(jnp.transpose(cur, (0, 3, 1, 2)))
    for o, r in zip(outs, ref_outs):
        err = float(jnp.max(jnp.abs(o - r)))
        assert jnp.allclose(o, r, atol=2e-2, rtol=2e-2), err

    print("KERNEL_OK")
</pallas_src>

<mosaic_0001>
module attributes {stable_mosaic.version = 11 : i64} {
  func.func @_head_kernel(%arg0: i32, %arg1: i32, %arg2: i32, %arg3: memref<128x128xbf16, #tpu.memory_space<vmem>>, %arg4: memref<128x128xbf16, #tpu.memory_space<vmem>>, %arg5: memref<1x128xf32, #tpu.memory_space<vmem>>, %arg6: memref<128x128xbf16, #tpu.memory_space<vmem>>, %arg7: memref<128x128xbf16, #tpu.memory_space<vmem>>, %arg8: memref<1x128xf32, #tpu.memory_space<vmem>>, %arg9: memref<128x128xf32, #tpu.memory_space<vmem>>, %arg10: memref<128x128xf32, #tpu.memory_space<vmem>>, %arg11: memref<128x128xf32, #tpu.memory_space<vmem>>, %arg12: memref<128x128xf32, #tpu.memory_space<vmem>>) attributes {dimension_semantics = [#tpu.dimension_semantics<parallel>, #tpu.dimension_semantics<parallel>, #tpu.dimension_semantics<arbitrary>], iteration_bounds = array<i64: 1, 1, 1>, scalar_prefetch = 0 : i64, scratch_operands = 2 : i64, tpu.core_type = #tpu.core_type<tc>, window_params = [{transform_indices = @transform_0, window_bounds = array<i64: 128, 128>}, {transform_indices = @transform_1, window_bounds = array<i64: 128, 128>}, {transform_indices = @transform_2, window_bounds = array<i64: 1, 128>}, {transform_indices = @transform_3, window_bounds = array<i64: 128, 128>}, {transform_indices = @transform_4, window_bounds = array<i64: 128, 128>}, {transform_indices = @transform_5, window_bounds = array<i64: 1, 128>}, {transform_indices = @transform_6, window_bounds = array<i64: 128, 128>}, {transform_indices = @transform_7, window_bounds = array<i64: 128, 128>}]} {
    %c0_i32 = arith.constant 0 : i32
    %0 = arith.cmpi eq, %arg2, %c0_i32 : i32
    %1 = arith.extui %0 : i1 to i32
    %c0_i32_0 = arith.constant 0 : i32
    %2 = arith.cmpi ne, %1, %c0_i32_0 : i32
    scf.if %2 {
      %cst_10 = arith.constant 0.000000e+00 : f32
      %12 = vector.broadcast %cst_10 : f32 to vector<128x128xf32>
      %c0_11 = arith.constant 0 : index
      %c0_12 = arith.constant 0 : index
      %13 = vector.load %arg11[%c0_11, %c0_12] : memref<128x128xf32, #tpu.memory_space<vmem>>, vector<128x128xf32>
      tpu.vector_store %arg11[%c0_11, %c0_12], %12 {strides = array<i32>} : memref<128x128xf32, #tpu.memory_space<vmem>>, vector<128x128xf32>,
      %c0_13 = arith.constant 0 : index
      %c0_14 = arith.constant 0 : index
      %14 = vector.load %arg6[%c0_13, %c0_14] : memref<128x128xbf16, #tpu.memory_space<vmem>>, vector<128x128xbf16>
      %c0_15 = arith.constant 0 : index
      %c0_16 = arith.constant 0 : index
      %15 = vector.load %arg7[%c0_15, %c0_16] : memref<128x128xbf16, #tpu.memory_space<vmem>>, vector<128x128xbf16>
      %cst_17 = arith.constant dense<0.000000e+00> : vector<128x128xf32>
      %16 = tpu.matmul %14, %15, %cst_17 {dimension_numbers = #tpu.dot_dimension_numbers<[1], [0], [0], [1], [0, 0, 1, 1], [], []>} : vector<128x128xbf16>, vector<128x128xbf16>, vector<128x128xf32> -> vector<128x128xf32>
      %c0_18 = arith.constant 0 : index
      %c0_19 = arith.constant 0 : index
      %17 = vector.load %arg12[%c0_18, %c0_19] : memref<128x128xf32, #tpu.memory_space<vmem>>, vector<128x128xf32>
      tpu.vector_store %arg12[%c0_18, %c0_19], %16 {strides = array<i32>} : memref<128x128xf32, #tpu.memory_space<vmem>>, vector<128x128xf32>,
    } else {
    }
    %c0 = arith.constant 0 : index
    %c0_1 = arith.constant 0 : index
    %3 = vector.load %arg11[%c0, %c0_1] : memref<128x128xf32, #tpu.memory_space<vmem>>, vector<128x128xf32>
    %c0_2 = arith.constant 0 : index
    %c0_3 = arith.constant 0 : index
    %4 = vector.load %arg3[%c0_2, %c0_3] : memref<128x128xbf16, #tpu.memory_space<vmem>>, vector<128x128xbf16>
    %c0_4 = arith.constant 0 : index
    %c0_5 = arith.constant 0 : index
    %5 = vector.load %arg4[%c0_4, %c0_5] : memref<128x128xbf16, #tpu.memory_space<vmem>>, vector<128x128xbf16>
    %cst = arith.constant dense<0.000000e+00> : vector<128x128xf32>
    %6 = tpu.matmul %4, %5, %cst {dimension_numbers = #tpu.dot_dimension_numbers<[1], [0], [0], [1], [0, 0, 1, 1], [], []>} : vector<128x128xbf16>, vector<128x128xbf16>, vector<128x128xf32> -> vector<128x128xf32>
    %7 = arith.addf %3, %6 : vector<128x128xf32>
    %c0_6 = arith.constant 0 : index
    %c0_7 = arith.constant 0 : index
    %8 = vector.load %arg11[%c0_6, %c0_7] : memref<128x128xf32, #tpu.memory_space<vmem>>, vector<128x128xf32>
    tpu.vector_store %arg11[%c0_6, %c0_7], %7 {strides = array<i32>} : memref<128x128xf32, #tpu.memory_space<vmem>>, vector<128x128xf32>,
    %c0_i32_8 = arith.constant 0 : i32
    %9 = arith.cmpi eq, %arg2, %c0_i32_8 : i32
    %10 = arith.extui %9 : i1 to i32
    %c0_i32_9 = arith.constant 0 : i32
    %11 = arith.cmpi ne, %10, %c0_i32_9 : i32
    scf.if %11 {
      %c0_10 = arith.constant 0 : index
      %c0_11 = arith.constant 0 : index
      %12 = vector.load %arg11[%c0_10, %c0_11] : memref<128x128xf32, #tpu.memory_space<vmem>>, vector<128x128xf32>
      %c0_12 = arith.constant 0 : index
      %c0_13 = arith.constant 0 : index
      %13 = vector.load %arg5[%c0_12, %c0_13] : memref<1x128xf32, #tpu.memory_space<vmem>>, vector<1x128xf32>
      %14 = vector.broadcast %13 : vector<1x128xf32> to vector<128x128xf32>
      %15 = arith.addf %12, %14 : vector<128x128xf32>
      %cst_14 = arith.constant 0.000000e+00 : f32
      %16 = vector.broadcast %cst_14 : f32 to vector<128x128xf32>
      %17 = arith.maximumf %15, %16 : vector<128x128xf32>
      %c0_15 = arith.constant 0 : index
      %c0_16 = arith.constant 0 : index
      %18 = vector.load %arg9[%c0_15, %c0_16] : memref<128x128xf32, #tpu.memory_space<vmem>>, vector<128x128xf32>
      tpu.vector_store %arg9[%c0_15, %c0_16], %17 {strides = array<i32>} : memref<128x128xf32, #tpu.memory_space<vmem>>, vector<128x128xf32>,
      %c0_17 = arith.constant 0 : index
      %c0_18 = arith.constant 0 : index
      %19 = vector.load %arg12[%c0_17, %c0_18] : memref<128x128xf32, #tpu.memory_space<vmem>>, vector<128x128xf32>
      %c0_19 = arith.constant 0 : index
      %c0_20 = arith.constant 0 : index
      %20 = vector.load %arg8[%c0_19, %c0_20] : memref<1x128xf32, #tpu.memory_space<vmem>>, vector<1x128xf32>
      %21 = vector.broadcast %20 : vector<1x128xf32> to vector<128x128xf32>
      %22 = arith.addf %19, %21 : vector<128x128xf32>
      %c0_21 = arith.constant 0 : index
      %c0_22 = arith.constant 0 : index
      %23 = vector.load %arg10[%c0_21, %c0_22] : memref<128x128xf32, #tpu.memory_space<vmem>>, vector<128x128xf32>
      tpu.vector_store %arg10[%c0_21, %c0_22], %22 {strides = array<i32>} : memref<128x128xf32, #tpu.memory_space<vmem>>, vector<128x128xf32>,
    } else {
    }
    return
  }
  func.func @transform_0(%arg0: i32, %arg1: i32, %arg2: i32) -> (i32, i32) {
    %c0_i32 = arith.constant 0 : i32
    return %arg0, %arg2 : i32, i32
  }
  func.func @transform_1(%arg0: i32, %arg1: i32, %arg2: i32) -> (i32, i32) {
    %c0_i32 = arith.constant 0 : i32
    return %arg2, %arg1 : i32, i32
  }
  func.func @transform_2(%arg0: i32, %arg1: i32, %arg2: i32) -> (i32, i32) {
    %c0_i32 = arith.constant 0 : i32
    %c0_i32_0 = arith.constant 0 : i32
    return %c0_i32, %arg1 : i32, i32
  }
  func.func @transform_3(%arg0: i32, %arg1: i32, %arg2: i32) -> (i32, i32) {
    %c0_i32 = arith.constant 0 : i32
    %c0_i32_0 = arith.constant 0 : i32
    return %arg0, %c0_i32 : i32, i32
  }
  func.func @transform_4(%arg0: i32, %arg1: i32, %arg2: i32) -> (i32, i32) {
    %c0_i32 = arith.constant 0 : i32
    %c0_i32_0 = arith.constant 0 : i32
    return %c0_i32, %arg1 : i32, i32
  }
  func.func @transform_5(%arg0: i32, %arg1: i32, %arg2: i32) -> (i32, i32) {
    %c0_i32 = arith.constant 0 : i32
    %c0_i32_0 = arith.constant 0 : i32
    return %c0_i32, %arg1 : i32, i32
  }
  func.func @transform_6(%arg0: i32, %arg1: i32, %arg2: i32) -> (i32, i32) {
    %c0_i32 = arith.constant 0 : i32
    return %arg0, %arg1 : i32, i32
  }
  func.func @transform_7(%arg0: i32, %arg1: i32, %arg2: i32) -> (i32, i32) {
    %c0_i32 = arith.constant 0 : i32
    return %arg0, %arg1 : i32, i32
  }
}

</mosaic_0001>

<llo_original>
// kernel: tpu_custom_call.1
$region0: #{tpu_custom_call.1}
  #allocation0 [shape = 'u32[]', space=smem, size = 0x4, offset = 0x4, fixed_abs, tag = 'smem constant byte address 0x4 - core index']
  #allocation1 [shape = 'u32[72,128]{1,0:T(1,128)}', space=vmem, size = 0x9000, scoped, tag = 'internal scratch']
  #allocation2 [shape = 'f32[128,128]{1,0:T(8,128)}', space=vmem, size = 0x10000, scoped, tag = 'scratch operand']
  #allocation3 [shape = 'f32[128,128]{1,0:T(8,128)}', space=vmem, size = 0x10000, scoped, tag = 'scratch operand']
  %s0 = inlined_call_operand.hbm [shape: bf16[128,128], index: 0, kind: input, shape index: {}]
  %s1 = inlined_call_operand.hbm [shape: bf16[128,128], index: 1, kind: input, shape index: {}]
  %s2 = inlined_call_operand.vmem [shape: f32[1,128], index: 2, kind: input, shape index: {}]
  %s3 = inlined_call_operand.hbm [shape: bf16[128,128], index: 3, kind: input, shape index: {}]
  %s4 = inlined_call_operand.hbm [shape: bf16[128,128], index: 4, kind: input, shape index: {}]
  %s5 = inlined_call_operand.vmem [shape: f32[1,128], index: 5, kind: input, shape index: {}]
  %s6 = inlined_call_operand.hbm [shape: f32[128,128], index: 6, kind: output, shape index: {0}]
  %s7 = inlined_call_operand.hbm [shape: f32[128,128], index: 7, kind: output, shape index: {1}]
  %8 = xla_tuple %s6, %s7
  %s9 = sld [smem:[#allocation0]]
  $region66: #{tpu_custom_call.1} parent=0
    _
  %s11 = ssub.s32 1, %s9
  %s12 = scalar_select 0, %s11, %s9
  $region1: #{tpu_custom_call.1} parent=0
    #allocation4 [shape = 'u8[32768]{0}', space=vmem, size = 0x8000, scoped, tag = 'input window, operand 0, single buffered']
    #allocation5 [shape = 's32[1]{0}', space=sflag, size = 0x4, scoped, tag = 'scoped memory for tpu_custom_call.1']
    #allocation6 [shape = 's32[1]{0}', space=sflag, size = 0x4, scoped, tag = 'scoped memory for tpu_custom_call.1']
    #allocation7 [shape = 'u8[32768]{0}', space=vmem, size = 0x8000, scoped, tag = 'input window, operand 1, single buffered']
    #allocation8 [shape = 's32[1]{0}', space=sflag, size = 0x4, scoped, tag = 'scoped memory for tpu_custom_call.1']
    #allocation9 [shape = 'u8[32768]{0}', space=vmem, size = 0x8000, scoped, tag = 'input window, operand 3, single buffered']
    #allocation10 [shape = 'u8[32768]{0}', space=vmem, size = 0x8000, scoped, tag = 'input window, operand 4, single buffered']
    #allocation11 [shape = 's32[1]{0}', space=sflag, size = 0x4, scoped, tag = 'scoped memory for tpu_custom_call.1']
    #allocation12 [shape = 'u8[65536]{0}', space=vmem, size = 0x10000, scoped, tag = 'output window, operand 0, single buffered']
    #allocation13 [shape = 'u8[65536]{0}', space=vmem, size = 0x10000, scoped, tag = 'output window, operand 1, single buffered']
    #allocation14 [shape = 's32[1]{0}', space=sflag, size = 0x4, scoped, tag = 'scoped memory for tpu_custom_call.1']
    %13 = vsyncpa [#allocation5], 0
    %14 = vsyncpa [#allocation8], 0
    %15 = vsyncpa [#allocation11], 0
    %16 = vsyncpa [#allocation6], 0
    %17 = vsyncpa [#allocation14], 0
    // Predicated region
    $region2: #{tpu_custom_call.1} parent=1 // pred_check
      _
    $region3: #{tpu_custom_call.1} parent=1 // pred_check_branch
      %19 = sbr.rel (0) target = $region5
    $region4: #{tpu_custom_call.1} parent=1 // pred_region
      %21 = vsyncadd [#allocation5], 0
      %s22 = sshll.u32 %s0, 4
      %s23 = int_to_ptr.hbm [resolvable:$true] %s22
      %s24 = sshll.u32 [#allocation4], 4
      %s25 = int_to_ptr.vmem [resolvable:$true] %s24
      %30 = dma.hbm_to_vmem [thread:$0]  %s23, 1024, %s25, [#allocation5], 64, 64, 4
    $region5: #{tpu_custom_call.1} parent=1 // pred_fallthru
      _
    // Predicated region
    $region6: #{tpu_custom_call.1} parent=1 // pred_check
      _
    $region7: #{tpu_custom_call.1} parent=1 // pred_check_branch
      %32 = sbr.rel (0) target = $region9
    $region8: #{tpu_custom_call.1} parent=1 // pred_region
      %34 = vsyncadd [#allocation8], 0
      %s35 = sshll.u32 %s1, 4
      %s36 = int_to_ptr.hbm [resolvable:$true] %s35
      %s37 = sshll.u32 [#allocation7], 4
      %s38 = int_to_ptr.vmem [resolvable:$true] %s37
      %43 = dma.hbm_to_vmem [thread:$0]  %s36, 1024, %s38, [#allocation8], 64, 64, 4
    $region9: #{tpu_custom_call.1} parent=1 // pred_fallthru
      _
    // Predicated region
    $region10: #{tpu_custom_call.1} parent=1 // pred_check
      _
    $region11: #{tpu_custom_call.1} parent=1 // pred_check_branch
      %45 = sbr.rel (0) target = $region13
    $region12: #{tpu_custom_call.1} parent=1 // pred_region
      _
    $region13: #{tpu_custom_call.1} parent=1 // pred_fallthru
      _
    // Predicated region
    $region14: #{tpu_custom_call.1} parent=1 // pred_check
      _
    $region15: #{tpu_custom_call.1} parent=1 // pred_check_branch
      %47 = sbr.rel (0) target = $region17
    $region16: #{tpu_custom_call.1} parent=1 // pred_region
      %49 = vsyncadd [#allocation8], 0
      %s50 = sshll.u32 %s3, 4
      %s51 = int_to_ptr.hbm [resolvable:$true] %s50
      %s52 = sshll.u32 [#allocation9], 4
      %s53 = int_to_ptr.vmem [resolvable:$true] %s52
      %58 = dma.hbm_to_vmem [thread:$0]  %s51, 1024, %s53, [#allocation8], 64, 64, 4
    $region17: #{tpu_custom_call.1} parent=1 // pred_fallthru
      _
    // Predicated region
    $region18: #{tpu_custom_call.1} parent=1 // pred_check
      _
    $region19: #{tpu_custom_call.1} parent=1 // pred_check_branch
      %60 = sbr.rel (0) target = $region21
    $region20: #{tpu_custom_call.1} parent=1 // pred_region
      %62 = vsyncadd [#allocation11], 0
      %s63 = sshll.u32 %s4, 4
      %s64 = int_to_ptr.hbm [resolvable:$true] %s63
      %s65 = sshll.u32 [#allocation10], 4
      %s66 = int_to_ptr.vmem [resolvable:$true] %s65
      %71 = dma.hbm_to_vmem [thread:$0]  %s64, 1024, %s66, [#allocation11], 64, 64, 4
    $region21: #{tpu_custom_call.1} parent=1 // pred_fallthru
      _
    // Predicated region
    $region22: #{tpu_custom_call.1} parent=1 // pred_check
      _
    $region23: #{tpu_custom_call.1} parent=1 // pred_check_branch
      %73 = sbr.rel (0) target = $region25
    $region24: #{tpu_custom_call.1} parent=1 // pred_region
      _
    $region25: #{tpu_custom_call.1} parent=1 // pred_fallthru
      _
    // Predicated region
    $region26: #{tpu_custom_call.1} parent=1 // pred_check
      _
    $region27: #{tpu_custom_call.1} parent=1 // pred_check_branch
      %75 = sbr.rel (0) target = $region29
    $region28: #{tpu_custom_call.1} parent=1 // pred_region
      %77 = dma.done [#allocation5], 1024
    $region29: #{tpu_custom_call.1} parent=1 // pred_fallthru
      _
    // Predicated region
    $region30: #{tpu_custom_call.1} parent=1 // pred_check
      _
    $region31: #{tpu_custom_call.1} parent=1 // pred_check_branch
      %79 = sbr.rel (0) target = $region33
    $region32: #{tpu_custom_call.1} parent=1 // pred_region
      %81 = dma.done [#allocation8], 1024
    $region33: #{tpu_custom_call.1} parent=1 // pred_fallthru
      _
    // Predicated region
    $region34: #{tpu_custom_call.1} parent=1 // pred_check
      _
    $region35: #{tpu_custom_call.1} parent=1 // pred_check_branch
      %83 = sbr.rel (0) target = $region37
    $region36: #{tpu_custom_call.1} parent=1 // pred_region
      %85 = dma.done [#allocation8], 1024
    $region37: #{tpu_custom_call.1} parent=1 // pred_fallthru
      _
    // Predicated region
    $region38: #{tpu_custom_call.1} parent=1 // pred_check
      _
    $region39: #{tpu_custom_call.1} parent=1 // pred_check_branch
      %87 = sbr.rel (0) target = $region41
    $region40: #{tpu_custom_call.1} parent=1 // pred_region
      %89 = dma.done [#allocation11], 1024
    $region41: #{tpu_custom_call.1} parent=1 // pred_fallthru
      _
    %p90 = scmp.eq.s32.totalorder 0, 0
    // Predicated region
    $region42: #{tpu_custom_call.1} parent=1 // pred_check
      %p91 = pneg %p90
    $region43: #{tpu_custom_call.1} parent=1 // pred_check_branch
      %93 = sbr.rel (%p91) target = $region45
    $region44: #{tpu_custom_call.1} parent=1 // pred_region
      %94 = vst [vmem:[#allocation2] sm:$0xff] 0.0
      %95 = vst [vmem:[#allocation2 + $0x8] sm:$0xff] 0.0
      %96 = vst [vmem:[#allocation2 + $0x10] sm:$0xff] 0.0
      %97 = vst [vmem:[#allocation2 + $0x18] sm:$0xff] 0.0
      %98 = vst [vmem:[#allocation2 + $0x20] sm:$0xff] 0.0
      %99 = vst [vmem:[#allocation2 + $0x28] sm:$0xff] 0.0
      %100 = vst [vmem:[#allocation2 + $0x30] sm:$0xff] 0.0
      %101 = vst [vmem:[#allocation2 + $0x38] sm:$0xff] 0.0
      %102 = vst [vmem:[#allocation2 + $0x40] sm:$0xff] 0.0
      %103 = vst [vmem:[#allocation2 + $0x48] sm:$0xff] 0.0
      %104 = vst [vmem:[#allocation2 + $0x50] sm:$0xff] 0.0
      %105 = vst [vmem:[#allocation2 + $0x58] sm:$0xff] 0.0
      %106 = vst [vmem:[#allocation2 + $0x60] sm:$0xff] 0.0
      %107 = vst [vmem:[#allocation2 + $0x68] sm:$0xff] 0.0
      %108 = vst [vmem:[#allocation2 + $0x70] sm:$0xff] 0.0
      %109 = vst [vmem:[#allocation2 + $0x78] sm:$0xff] 0.0
      %v110 = vld [vmem:[#allocation9] sm:$0xf]
      %v111 = vld [vmem:[#allocation9 + $0x4] sm:$0xf]
      %v112 = vld [vmem:[#allocation9 + $0x8] sm:$0xf]
      %v113 = vld [vmem:[#allocation9 + $0xc] sm:$0xf]
      %v114 = vld [vmem:[#allocation9 + $0x10] sm:$0xf]
      %v115 = vld [vmem:[#allocation9 + $0x14] sm:$0xf]
      %v116 = vld [vmem:[#allocation9 + $0x18] sm:$0xf]
      %v117 = vld [vmem:[#allocation9 + $0x1c] sm:$0xf]
      %v118 = vld [vmem:[#allocation9 + $0x20] sm:$0xf]
      %v119 = vld [vmem:[#allocation9 + $0x24] sm:$0xf]
      %v120 = vld [vmem:[#allocation9 + $0x28] sm:$0xf]
      %v121 = vld [vmem:[#allocation9 + $0x2c] sm:$0xf]
      %v122 = vld [vmem:[#allocation9 + $0x30] sm:$0xf]
      %v123 = vld [vmem:[#allocation9 + $0x34] sm:$0xf]
      %v124 = vld [vmem:[#allocation9 + $0x38] sm:$0xf]
      %v125 = vld [vmem:[#allocation9 + $0x3c] sm:$0xf]
      %v126 = vld [vmem:[#allocation10] sm:$0xf]
      %v127 = vld [vmem:[#allocation10 + $0x4] sm:$0xf]
      %v128 = vld [vmem:[#allocation10 + $0x8] sm:$0xf]
      %v129 = vld [vmem:[#allocation10 + $0xc] sm:$0xf]
      %v130 = vld [vmem:[#allocation10 + $0x10] sm:$0xf]
      %v131 = vld [vmem:[#allocation10 + $0x14] sm:$0xf]
      %v132 = vld [vmem:[#allocation10 + $0x18] sm:$0xf]
      %v133 = vld [vmem:[#allocation10 + $0x1c] sm:$0xf]
      %v134 = vld [vmem:[#allocation10 + $0x20] sm:$0xf]
      %v135 = vld [vmem:[#allocation10 + $0x24] sm:$0xf]
      %v136 = vld [vmem:[#allocation10 + $0x28] sm:$0xf]
      %v137 = vld [vmem:[#allocation10 + $0x2c] sm:$0xf]
      %v138 = vld [vmem:[#allocation10 + $0x30] sm:$0xf]
      %v139 = vld [vmem:[#allocation10 + $0x34] sm:$0xf]
      %v140 = vld [vmem:[#allocation10 + $0x38] sm:$0xf]
      %v141 = vld [vmem:[#allocation10 + $0x3c] sm:$0xf]
      %v158 = vunpack.c.l.b16 %v110
      %v159 = vunpack.c.l.b16 %v111
      %v160 = vunpack.c.l.b16 %v112
      %v161 = vunpack.c.l.b16 %v113
      %v162 = vunpack.c.l.b16 %v114
      %v163 = vunpack.c.l.b16 %v115
      %v164 = vunpack.c.l.b16 %v116
      %v165 = vunpack.c.l.b16 %v117
      %v166 = vunpack.c.l.b16 %v118
      %v167 = vunpack.c.l.b16 %v119
      %v168 = vunpack.c.l.b16 %v120
      %v169 = vunpack.c.l.b16 %v121
      %v170 = vunpack.c.l.b16 %v122
      %v171 = vunpack.c.l.b16 %v123
      %v172 = vunpack.c.l.b16 %v124
      %v173 = vunpack.c.l.b16 %v125
      %v174 = vpack.c.b16 %v159, %v158
      %v175 = vpack.c.b16 %v161, %v160
      %v176 = vpack.c.b16 %v163, %v162
      %v177 = vpack.c.b16 %v165, %v164
      %v178 = vpack.c.b16 %v167, %v166
      %v179 = vpack.c.b16 %v169, %v168
      %v180 = vpack.c.b16 %v171, %v170
      %v181 = vpack.c.b16 %v173, %v172
      %v206 = vunpack.c.l.b16 %v126
      %v207 = vunpack.c.l.b16 %v127
      %v208 = vunpack.c.l.b16 %v128
      %v209 = vunpack.c.l.b16 %v129
      %v210 = vunpack.c.l.b16 %v130
      %v211 = vunpack.c.l.b16 %v131
      %v212 = vunpack.c.l.b16 %v132
      %v213 = vunpack.c.l.b16 %v133
      %v214 = vunpack.c.l.b16 %v134
      %v215 = vunpack.c.l.b16 %v135
      %v216 = vunpack.c.l.b16 %v136
      %v217 = vunpack.c.l.b16 %v137
      %v218 = vunpack.c.l.b16 %v138
      %v219 = vunpack.c.l.b16 %v139
      %v220 = vunpack.c.l.b16 %v140
      %v221 = vunpack.c.l.b16 %v141
      %v222 = vpack.c.b16 %v207, %v206
      %v223 = vpack.c.b16 %v209, %v208
      %v224 = vpack.c.b16 %v211, %v210
      %v225 = vpack.c.b16 %v213, %v212
      %v226 = vpack.c.b16 %v215, %v214
      %v227 = vpack.c.b16 %v217, %v216
      %v228 = vpack.c.b16 %v219, %v218
      %v229 = vpack.c.b16 %v221, %v220
      %238 = vmatpush.bf16.msra.mxu0 %v229
      %239 = vmatpush.bf16.msra.mxu0 %v228
      %240 = vmatpush.bf16.msra.mxu0 %v227
      %241 = vmatpush.bf16.msra.mxu0 %v226
      %242 = vmatpush.bf16.msra.mxu0 %v225
      %243 = vmatpush.bf16.msra.mxu0 %v224
      %244 = vmatpush.bf16.msra.mxu0 %v223
      %245 = vmatpush.bf16.msra.mxu0 %v222
      %246 = vmatmul.bf16.gmra.mxu0 %v174
      %v247 = vpop.f32.mrf.mxu0
      %v248 = vadd.f32 0.0, %v247
      %v249 = vpop.f32.mrf.mxu0
      %v250 = vadd.f32 0.0, %v249
      %251 = vmatmul.bf16.gmra.mxu0 %v175
      %v252 = vpop.f32.mrf.mxu0
      %v253 = vadd.f32 0.0, %v252
      %v254 = vpop.f32.mrf.mxu0
      %v255 = vadd.f32 0.0, %v254
      %256 = vmatmul.bf16.gmra.mxu0 %v176
      %v257 = vpop.f32.mrf.mxu0
      %v258 = vadd.f32 0.0, %v257
      %v259 = vpop.f32.mrf.mxu0
      %v260 = vadd.f32 0.0, %v259
      %261 = vmatmul.bf16.gmra.mxu0 %v177
      %v262 = vpop.f32.mrf.mxu0
      %v263 = vadd.f32 0.0, %v262
      %v264 = vpop.f32.mrf.mxu0
      %v265 = vadd.f32 0.0, %v264
      %266 = vmatmul.bf16.gmra.mxu0 %v178
      %v267 = vpop.f32.mrf.mxu0
      %v268 = vadd.f32 0.0, %v267
      %v269 = vpop.f32.mrf.mxu0
      %v270 = vadd.f32 0.0, %v269
      %271 = vmatmul.bf16.gmra.mxu0 %v179
      %v272 = vpop.f32.mrf.mxu0
      %v273 = vadd.f32 0.0, %v272
      %v274 = vpop.f32.mrf.mxu0
      %v275 = vadd.f32 0.0, %v274
      %276 = vmatmul.bf16.gmra.mxu0 %v180
      %v277 = vpop.f32.mrf.mxu0
      %v278 = vadd.f32 0.0, %v277
      %v279 = vpop.f32.mrf.mxu0
      %v280 = vadd.f32 0.0, %v279
      %281 = vmatmul.bf16.gmra.mxu0 %v181
      %v282 = vpop.f32.mrf.mxu0
      %v283 = vadd.f32 0.0, %v282
      %v284 = vpop.f32.mrf.mxu0
      %v285 = vadd.f32 0.0, %v284
      %286 = vdwg.mxu0
      %287 = vst [vmem:[#allocation3] sm:$0xff] %v248
      %288 = vst [vmem:[#allocation3 + $0x8] sm:$0xff] %v250
      %289 = vst [vmem:[#allocation3 + $0x10] sm:$0xff] %v253
      %290 = vst [vmem:[#allocation3 + $0x18] sm:$0xff] %v255
      %291 = vst [vmem:[#allocation3 + $0x20] sm:$0xff] %v258
      %292 = vst [vmem:[#allocation3 + $0x28] sm:$0xff] %v260
      %293 = vst [vmem:[#allocation3 + $0x30] sm:$0xff] %v263
      %294 = vst [vmem:[#allocation3 + $0x38] sm:$0xff] %v265
      %295 = vst [vmem:[#allocation3 + $0x40] sm:$0xff] %v268
      %296 = vst [vmem:[#allocation3 + $0x48] sm:$0xff] %v270
      %297 = vst [vmem:[#allocation3 + $0x50] sm:$0xff] %v273
      %298 = vst [vmem:[#allocation3 + $0x58] sm:$0xff] %v275
      %299 = vst [vmem:[#allocation3 + $0x60] sm:$0xff] %v278
      %300 = vst [vmem:[#allocation3 + $0x68] sm:$0xff] %v280
      %301 = vst [vmem:[#allocation3 + $0x70] sm:$0xff] %v283
      %302 = vst [vmem:[#allocation3 + $0x78] sm:$0xff] %v285
    $region45: #{tpu_custom_call.1} parent=1 // pred_fallthru
      _
    %v303 = vld [vmem:[#allocation2] sm:$0xff]
    %v304 = vld [vmem:[#allocation2 + $0x8] sm:$0xff]
    %v305 = vld [vmem:[#allocation2 + $0x10] sm:$0xff]
    %v306 = vld [vmem:[#allocation2 + $0x18] sm:$0xff]
    %v307 = vld [vmem:[#allocation2 + $0x20] sm:$0xff]
    %v308 = vld [vmem:[#allocation2 + $0x28] sm:$0xff]
    %v309 = vld [vmem:[#allocation2 + $0x30] sm:$0xff]
    %v310 = vld [vmem:[#allocation2 + $0x38] sm:$0xff]
    %v311 = vld [vmem:[#allocation2 + $0x40] sm:$0xff]
    %v312 = vld [vmem:[#allocation2 + $0x48] sm:$0xff]
    %v313 = vld [vmem:[#allocation2 + $0x50] sm:$0xff]
    %v314 = vld [vmem:[#allocation2 + $0x58] sm:$0xff]
    %v315 = vld [vmem:[#allocation2 + $0x60] sm:$0xff]
    %v316 = vld [vmem:[#allocation2 + $0x68] sm:$0xff]
    %v317 = vld [vmem:[#allocation2 + $0x70] sm:$0xff]
    %v318 = vld [vmem:[#allocation2 + $0x78] sm:$0xff]
    %v319 = vld [vmem:[#allocation4] sm:$0xf]
    %v320 = vld [vmem:[#allocation4 + $0x4] sm:$0xf]
    %v321 = vld [vmem:[#allocation4 + $0x8] sm:$0xf]
    %v322 = vld [vmem:[#allocation4 + $0xc] sm:$0xf]
    %v323 = vld [vmem:[#allocation4 + $0x10] sm:$0xf]
    %v324 = vld [vmem:[#allocation4 + $0x14] sm:$0xf]
    %v325 = vld [vmem:[#allocation4 + $0x18] sm:$0xf]
    %v326 = vld [vmem:[#allocation4 + $0x1c] sm:$0xf]
    %v327 = vld [vmem:[#allocation4 + $0x20] sm:$0xf]
    %v328 = vld [vmem:[#allocation4 + $0x24] sm:$0xf]
    %v329 = vld [vmem:[#allocation4 + $0x28] sm:$0xf]
    %v330 = vld [vmem:[#allocation4 + $0x2c] sm:$0xf]
    %v331 = vld [vmem:[#allocation4 + $0x30] sm:$0xf]
    %v332 = vld [vmem:[#allocation4 + $0x34] sm:$0xf]
    %v333 = vld [vmem:[#allocation4 + $0x38] sm:$0xf]
    %v334 = vld [vmem:[#allocation4 + $0x3c] sm:$0xf]
    %v335 = vld [vmem:[#allocation7] sm:$0xf]
    %v336 = vld [vmem:[#allocation7 + $0x4] sm:$0xf]
    %v337 = vld [vmem:[#allocation7 + $0x8] sm:$0xf]
    %v338 = vld [vmem:[#allocation7 + $0xc] sm:$0xf]
    %v339 = vld [vmem:[#allocation7 + $0x10] sm:$0xf]
    %v340 = vld [vmem:[#allocation7 + $0x14] sm:$0xf]
    %v341 = vld [vmem:[#allocation7 + $0x18] sm:$0xf]
    %v342 = vld [vmem:[#allocation7 + $0x1c] sm:$0xf]
    %v343 = vld [vmem:[#allocation7 + $0x20] sm:$0xf]
    %v344 = vld [vmem:[#allocation7 + $0x24] sm:$0xf]
    %v345 = vld [vmem:[#allocation7 + $0x28] sm:$0xf]
    %v346 = vld [vmem:[#allocation7 + $0x2c] sm:$0xf]
    %v347 = vld [vmem:[#allocation7 + $0x30] sm:$0xf]
    %v348 = vld [vmem:[#allocation7 + $0x34] sm:$0xf]
    %v349 = vld [vmem:[#allocation7 + $0x38] sm:$0xf]
    %v350 = vld [vmem:[#allocation7 + $0x3c] sm:$0xf]
    %v367 = vunpack.c.l.b16 %v319
    %v368 = vunpack.c.l.b16 %v320
    %v369 = vunpack.c.l.b16 %v321
    %v370 = vunpack.c.l.b16 %v322
    %v371 = vunpack.c.l.b16 %v323
    %v372 = vunpack.c.l.b16 %v324
    %v373 = vunpack.c.l.b16 %v325
    %v374 = vunpack.c.l.b16 %v326
    %v375 = vunpack.c.l.b16 %v327
    %v376 = vunpack.c.l.b16 %v328
    %v377 = vunpack.c.l.b16 %v329
    %v378 = vunpack.c.l.b16 %v330
    %v379 = vunpack.c.l.b16 %v331
    %v380 = vunpack.c.l.b16 %v332
    %v381 = vunpack.c.l.b16 %v333
    %v382 = vunpack.c.l.b16 %v334
    %v383 = vpack.c.b16 %v368, %v367
    %v384 = vpack.c.b16 %v370, %v369
    %v385 = vpack.c.b16 %v372, %v371
    %v386 = vpack.c.b16 %v374, %v373
    %v387 = vpack.c.b16 %v376, %v375
    %v388 = vpack.c.b16 %v378, %v377
    %v389 = vpack.c.b16 %v380, %v379
    %v390 = vpack.c.b16 %v382, %v381
    %v415 = vunpack.c.l.b16 %v335
    %v416 = vunpack.c.l.b16 %v336
    %v417 = vunpack.c.l.b16 %v337
    %v418 = vunpack.c.l.b16 %v338
    %v419 = vunpack.c.l.b16 %v339
    %v420 = vunpack.c.l.b16 %v340
    %v421 = vunpack.c.l.b16 %v341
    %v422 = vunpack.c.l.b16 %v342
    %v423 = vunpack.c.l.b16 %v343
    %v424 = vunpack.c.l.b16 %v344
    %v425 = vunpack.c.l.b16 %v345
    %v426 = vunpack.c.l.b16 %v346
    %v427 = vunpack.c.l.b16 %v347
    %v428 = vunpack.c.l.b16 %v348
    %v429 = vunpack.c.l.b16 %v349
    %v430 = vunpack.c.l.b16 %v350
    %v431 = vpack.c.b16 %v416, %v415
    %v432 = vpack.c.b16 %v418, %v417
    %v433 = vpack.c.b16 %v420, %v419
    %v434 = vpack.c.b16 %v422, %v421
    %v435 = vpack.c.b16 %v424, %v423
    %v436 = vpack.c.b16 %v426, %v425
    %v437 = vpack.c.b16 %v428, %v427
    %v438 = vpack.c.b16 %v430, %v429
    %447 = vmatpush.bf16.msra.mxu0 %v438
    %448 = vmatpush.bf16.msra.mxu0 %v437
    %449 = vmatpush.bf16.msra.mxu0 %v436
    %450 = vmatpush.bf16.msra.mxu0 %v435
    %451 = vmatpush.bf16.msra.mxu0 %v434
    %452 = vmatpush.bf16.msra.mxu0 %v433
    %453 = vmatpush.bf16.msra.mxu0 %v432
    %454 = vmatpush.bf16.msra.mxu0 %v431
    %455 = vmatmul.bf16.gmra.mxu0 %v383
    %v456 = vpop.f32.mrf.mxu0
    %v457 = vadd.f32 0.0, %v456
    %v458 = vpop.f32.mrf.mxu0
    %v459 = vadd.f32 0.0, %v458
    %460 = vmatmul.bf16.gmra.mxu0 %v384
    %v461 = vpop.f32.mrf.mxu0
    %v462 = vadd.f32 0.0, %v461
    %v463 = vpop.f32.mrf.mxu0
    %v464 = vadd.f32 0.0, %v463
    %465 = vmatmul.bf16.gmra.mxu0 %v385
    %v466 = vpop.f32.mrf.mxu0
    %v467 = vadd.f32 0.0, %v466
    %v468 = vpop.f32.mrf.mxu0
    %v469 = vadd.f32 0.0, %v468
    %470 = vmatmul.bf16.gmra.mxu0 %v386
    %v471 = vpop.f32.mrf.mxu0
    %v472 = vadd.f32 0.0, %v471
    %v473 = vpop.f32.mrf.mxu0
    %v474 = vadd.f32 0.0, %v473
    %475 = vmatmul.bf16.gmra.mxu0 %v387
    %v476 = vpop.f32.mrf.mxu0
    %v477 = vadd.f32 0.0, %v476
    %v478 = vpop.f32.mrf.mxu0
    %v479 = vadd.f32 0.0, %v478
    %480 = vmatmul.bf16.gmra.mxu0 %v388
    %v481 = vpop.f32.mrf.mxu0
    %v482 = vadd.f32 0.0, %v481
    %v483 = vpop.f32.mrf.mxu0
    %v484 = vadd.f32 0.0, %v483
    %485 = vmatmul.bf16.gmra.mxu0 %v389
    %v486 = vpop.f32.mrf.mxu0
    %v487 = vadd.f32 0.0, %v486
    %v488 = vpop.f32.mrf.mxu0
    %v489 = vadd.f32 0.0, %v488
    %490 = vmatmul.bf16.gmra.mxu0 %v390
    %v491 = vpop.f32.mrf.mxu0
    %v492 = vadd.f32 0.0, %v491
    %v493 = vpop.f32.mrf.mxu0
    %v494 = vadd.f32 0.0, %v493
    %495 = vdwg.mxu0
    %v496 = vadd.f32 %v303, %v457
    %v497 = vadd.f32 %v304, %v459
    %v498 = vadd.f32 %v305, %v462
    %v499 = vadd.f32 %v306, %v464
    %v500 = vadd.f32 %v307, %v467
    %v501 = vadd.f32 %v308, %v469
    %v502 = vadd.f32 %v309, %v472
    %v503 = vadd.f32 %v310, %v474
    %v504 = vadd.f32 %v311, %v477
    %v505 = vadd.f32 %v312, %v479
    %v506 = vadd.f32 %v313, %v482
    %v507 = vadd.f32 %v314, %v484
    %v508 = vadd.f32 %v315, %v487
    %v509 = vadd.f32 %v316, %v489
    %v510 = vadd.f32 %v317, %v492
    %v511 = vadd.f32 %v318, %v494
    %512 = vst [vmem:[#allocation2] sm:$0xff] %v496
    %513 = vst [vmem:[#allocation2 + $0x8] sm:$0xff] %v497
    %514 = vst [vmem:[#allocation2 + $0x10] sm:$0xff] %v498
    %515 = vst [vmem:[#allocation2 + $0x18] sm:$0xff] %v499
    %516 = vst [vmem:[#allocation2 + $0x20] sm:$0xff] %v500
    %517 = vst [vmem:[#allocation2 + $0x28] sm:$0xff] %v501
    %518 = vst [vmem:[#allocation2 + $0x30] sm:$0xff] %v502
    %519 = vst [vmem:[#allocation2 + $0x38] sm:$0xff] %v503
    %520 = vst [vmem:[#allocation2 + $0x40] sm:$0xff] %v504
    %521 = vst [vmem:[#allocation2 + $0x48] sm:$0xff] %v505
    %522 = vst [vmem:[#allocation2 + $0x50] sm:$0xff] %v506
    %523 = vst [vmem:[#allocation2 + $0x58] sm:$0xff] %v507
    %524 = vst [vmem:[#allocation2 + $0x60] sm:$0xff] %v508
    %525 = vst [vmem:[#allocation2 + $0x68] sm:$0xff] %v509
    %526 = vst [vmem:[#allocation2 + $0x70] sm:$0xff] %v510
    %527 = vst [vmem:[#allocation2 + $0x78] sm:$0xff] %v511
    // Predicated region
    $region46: #{tpu_custom_call.1} parent=1 // pred_check
      %p528 = pneg %p90
    $region47: #{tpu_custom_call.1} parent=1 // pred_check_branch
      %530 = sbr.rel (%p528) target = $region49
    $region48: #{tpu_custom_call.1} parent=1 // pred_region
      %v531 = vld [vmem:[#allocation2] sm:$0xff]
      %v532 = vld [vmem:[#allocation2 + $0x8] sm:$0xff]
      %v533 = vld [vmem:[#allocation2 + $0x10] sm:$0xff]
      %v534 = vld [vmem:[#allocation2 + $0x18] sm:$0xff]
      %v535 = vld [vmem:[#allocation2 + $0x20] sm:$0xff]
      %v536 = vld [vmem:[#allocation2 + $0x28] sm:$0xff]
      %v537 = vld [vmem:[#allocation2 + $0x30] sm:$0xff]
      %v538 = vld [vmem:[#allocation2 + $0x38] sm:$0xff]
      %v539 = vld [vmem:[#allocation2 + $0x40] sm:$0xff]
      %v540 = vld [vmem:[#allocation2 + $0x48] sm:$0xff]
      %v541 = vld [vmem:[#allocation2 + $0x50] sm:$0xff]
      %v542 = vld [vmem:[#allocation2 + $0x58] sm:$0xff]
      %v543 = vld [vmem:[#allocation2 + $0x60] sm:$0xff]
      %v544 = vld [vmem:[#allocation2 + $0x68] sm:$0xff]
      %v545 = vld [vmem:[#allocation2 + $0x70] sm:$0xff]
      %v546 = vld [vmem:[#allocation2 + $0x78] sm:$0xff]
      %v547 = vld [vmem:[%s2] sm:$0x1]
      %v549 = vperm.slane %v547, 0
      %v551 = vadd.f32 %v531, %v549
      %v552 = vadd.f32 %v532, %v549
      %v553 = vadd.f32 %v533, %v549
      %v554 = vadd.f32 %v534, %v549
      %v555 = vadd.f32 %v535, %v549
      %v556 = vadd.f32 %v536, %v549
      %v557 = vadd.f32 %v537, %v549
      %v558 = vadd.f32 %v538, %v549
      %v559 = vadd.f32 %v539, %v549
      %v560 = vadd.f32 %v540, %v549
      %v561 = vadd.f32 %v541, %v549
      %v562 = vadd.f32 %v542, %v549
      %v563 = vadd.f32 %v543, %v549
      %v564 = vadd.f32 %v544, %v549
      %v565 = vadd.f32 %v545, %v549
      %v566 = vadd.f32 %v546, %v549
      %v567 = vmax.f32 %v551, 0.0
      %v568 = vmax.f32 %v552, 0.0
      %v569 = vmax.f32 %v553, 0.0
      %v570 = vmax.f32 %v554, 0.0
      %v571 = vmax.f32 %v555, 0.0
      %v572 = vmax.f32 %v556, 0.0
      %v573 = vmax.f32 %v557, 0.0
      %v574 = vmax.f32 %v558, 0.0
      %v575 = vmax.f32 %v559, 0.0
      %v576 = vmax.f32 %v560, 0.0
      %v577 = vmax.f32 %v561, 0.0
      %v578 = vmax.f32 %v562, 0.0
      %v579 = vmax.f32 %v563, 0.0
      %v580 = vmax.f32 %v564, 0.0
      %v581 = vmax.f32 %v565, 0.0
      %v582 = vmax.f32 %v566, 0.0
      %583 = vst [vmem:[#allocation12] sm:$0xff] %v567
      %584 = vst [vmem:[#allocation12 + $0x8] sm:$0xff] %v568
      %585 = vst [vmem:[#allocation12 + $0x10] sm:$0xff] %v569
      %586 = vst [vmem:[#allocation12 + $0x18] sm:$0xff] %v570
      %587 = vst [vmem:[#allocation12 + $0x20] sm:$0xff] %v571
      %588 = vst [vmem:[#allocation12 + $0x28] sm:$0xff] %v572
      %589 = vst [vmem:[#allocation12 + $0x30] sm:$0xff] %v573
      %590 = vst [vmem:[#allocation12 + $0x38] sm:$0xff] %v574
      %591 = vst [vmem:[#allocation12 + $0x40] sm:$0xff] %v575
      %592 = vst [vmem:[#allocation12 + $0x48] sm:$0xff] %v576
      %593 = vst [vmem:[#allocation12 + $0x50] sm:$0xff] %v577
      %594 = vst [vmem:[#allocation12 + $0x58] sm:$0xff] %v578
      %595 = vst [vmem:[#allocation12 + $0x60] sm:$0xff] %v579
      %596 = vst [vmem:[#allocation12 + $0x68] sm:$0xff] %v580
      %597 = vst [vmem:[#allocation12 + $0x70] sm:$0xff] %v581
      %598 = vst [vmem:[#allocation12 + $0x78] sm:$0xff] %v582
      %v599 = vld [vmem:[#allocation3] sm:$0xff]
      %v600 = vld [vmem:[#allocation3 + $0x8] sm:$0xff]
      %v601 = vld [vmem:[#allocation3 + $0x10] sm:$0xff]
      %v602 = vld [vmem:[#allocation3 + $0x18] sm:$0xff]
      %v603 = vld [vmem:[#allocation3 + $0x20] sm:$0xff]
      %v604 = vld [vmem:[#allocation3 + $0x28] sm:$0xff]
      %v605 = vld [vmem:[#allocation3 + $0x30] sm:$0xff]
      %v606 = vld [vmem:[#allocation3 + $0x38] sm:$0xff]
      %v607 = vld [vmem:[#allocation3 + $0x40] sm:$0xff]
      %v608 = vld [vmem:[#allocation3 + $0x48] sm:$0xff]
      %v609 = vld [vmem:[#allocation3 + $0x50] sm:$0xff]
      %v610 = vld [vmem:[#allocation3 + $0x58] sm:$0xff]
      %v611 = vld [vmem:[#allocation3 + $0x60] sm:$0xff]
      %v612 = vld [vmem:[#allocation3 + $0x68] sm:$0xff]
      %v613 = vld [vmem:[#allocation3 + $0x70] sm:$0xff]
      %v614 = vld [vmem:[#allocation3 + $0x78] sm:$0xff]
      %v615 = vld [vmem:[%s5] sm:$0x1]
      %v617 = vperm.slane %v615, 0
      %v619 = vadd.f32 %v599, %v617
      %v620 = vadd.f32 %v600, %v617
      %v621 = vadd.f32 %v601, %v617
      %v622 = vadd.f32 %v602, %v617
      %v623 = vadd.f32 %v603, %v617
      %v624 = vadd.f32 %v604, %v617
      %v625 = vadd.f32 %v605, %v617
      %v626 = vadd.f32 %v606, %v617
      %v627 = vadd.f32 %v607, %v617
      %v628 = vadd.f32 %v608, %v617
      %v629 = vadd.f32 %v609, %v617
      %v630 = vadd.f32 %v610, %v617
      %v631 = vadd.f32 %v611, %v617
      %v632 = vadd.f32 %v612, %v617
      %v633 = vadd.f32 %v613, %v617
      %v634 = vadd.f32 %v614, %v617
      %635 = vst [vmem:[#allocation13] sm:$0xff] %v619
      %636 = vst [vmem:[#allocation13 + $0x8] sm:$0xff] %v620
      %637 = vst [vmem:[#allocation13 + $0x10] sm:$0xff] %v621
      %638 = vst [vmem:[#allocation13 + $0x18] sm:$0xff] %v622
      %639 = vst [vmem:[#allocation13 + $0x20] sm:$0xff] %v623
      %640 = vst [vmem:[#allocation13 + $0x28] sm:$0xff] %v624
      %641 = vst [vmem:[#allocation13 + $0x30] sm:$0xff] %v625
      %642 = vst [vmem:[#allocation13 + $0x38] sm:$0xff] %v626
      %643 = vst [vmem:[#allocation13 + $0x40] sm:$0xff] %v627
      %644 = vst [vmem:[#allocation13 + $0x48] sm:$0xff] %v628
      %645 = vst [vmem:[#allocation13 + $0x50] sm:$0xff] %v629
      %646 = vst [vmem:[#allocation13 + $0x58] sm:$0xff] %v630
      %647 = vst [vmem:[#allocation13 + $0x60] sm:$0xff] %v631
      %648 = vst [vmem:[#allocation13 + $0x68] sm:$0xff] %v632
      %649 = vst [vmem:[#allocation13 + $0x70] sm:$0xff] %v633
      %650 = vst [vmem:[#allocation13 + $0x78] sm:$0xff] %v634
    $region49: #{tpu_custom_call.1} parent=1 // pred_fallthru
      _
    // Predicated region
    $region50: #{tpu_custom_call.1} parent=1 // pred_check
      _
    $region51: #{tpu_custom_call.1} parent=1 // pred_check_branch
      %652 = sbr.rel (0) target = $region53
    $region52: #{tpu_custom_call.1} parent=1 // pred_region
      %654 = vsyncadd [#allocation6], 0
      %s655 = sshll.u32 [#allocation12], 4
      %s656 = int_to_ptr.vmem [resolvable:$true] %s655
      %s657 = sshll.u32 %s6, 4
      %s658 = int_to_ptr.hbm [resolvable:$true] %s657
      %663 = dma.vmem_to_hbm [thread:$0]  %s656, 2048, %s658, [#allocation6], 128, 128, 8
    $region53: #{tpu_custom_call.1} parent=1 // pred_fallthru
      _
    // Predicated region
    $region54: #{tpu_custom_call.1} parent=1 // pred_check
      _
    $region55: #{tpu_custom_call.1} parent=1 // pred_check_branch
      %665 = sbr.rel (0) target = $region57
    $region56: #{tpu_custom_call.1} parent=1 // pred_region
      %667 = vsyncadd [#allocation14], 0
      %s668 = sshll.u32 [#allocation13], 4
      %s669 = int_to_ptr.vmem [resolvable:$true] %s668
      %s670 = sshll.u32 %s7, 4
      %s671 = int_to_ptr.hbm [resolvable:$true] %s670
      %676 = dma.vmem_to_hbm [thread:$0]  %s669, 2048, %s671, [#allocation14], 128, 128, 8
    $region57: #{tpu_custom_call.1} parent=1 // pred_fallthru
      _
    // Predicated region
    $region58: #{tpu_custom_call.1} parent=1 // pred_check
      _
    $region59: #{tpu_custom_call.1} parent=1 // pred_check_branch
      %678 = sbr.rel (0) target = $region61
    $region60: #{tpu_custom_call.1} parent=1 // pred_region
      %680 = dma.done [#allocation6], 2048
    $region61: #{tpu_custom_call.1} parent=1 // pred_fallthru
      _
    // Predicated region
    $region62: #{tpu_custom_call.1} parent=1 // pred_check
      _
    $region63: #{tpu_custom_call.1} parent=1 // pred_check_branch
      %682 = sbr.rel (0) target = $region65
    $region64: #{tpu_custom_call.1} parent=1 // pred_region
      %684 = dma.done [#allocation14], 2048
    $region65: #{tpu_custom_call.1} parent=1 // pred_fallthru
      _
    %685 = vsyncpa [#allocation5], 1
    %686 = vsyncpa [#allocation8], 1
    %687 = vsyncpa [#allocation11], 1
    %688 = vsyncpa [#allocation6], 1
    %689 = vsyncpa [#allocation14], 1

</llo_original>
